<compile_context>
chip_gen: v7x
topology: tpu7x:2x2x1
jax: 0.10.0
libtpu: 0.0.40
codegen_flags: <defaults>
</compile_context>

<pallas_src>
import functools

import jax
import jax.numpy as jnp
from jax.experimental import pallas as pl
from jax.experimental.pallas import tpu as pltpu

LN_EPS = 1e-5                       # torch.nn.LayerNorm default
_VMEM_LIMIT = 48 * 1024 * 1024      # > scoped defaults, headroom under v7x 64 MiB


def _largest_divisor_leq(n, target):
    """Largest divisor of n that is <= target (keeps every tile full)."""
    t = max(1, min(n, target))
    while n % t:
        t -= 1
    return t


def _layernorm_rows(x, g, b, eps):
    """LayerNorm over the last axis (torch semantics: biased var, eps in sqrt).

    Two-pass variance (avoids E[x^2]-mean^2 cancellation) and the 2-mul
    affine form; rsqrt lowers to the EUP slot."""
    mean = jnp.mean(x, axis=-1, keepdims=True)
    xc = x - mean
    var = jnp.mean(xc * xc, axis=-1, keepdims=True)
    scale = jax.lax.rsqrt(var + eps) * g
    return xc * scale + b


# ----------------------------------------------------------------------------
# Kernel 1: context path — LN(context), mean-pool over Nc (tiled reduction),
#           then (Bb, Dc) @ (Dc, D) -> per-batch bias hc.
# ----------------------------------------------------------------------------
def _context_pool_kernel(c_ref, gc_ref, bcst_ref, wc_ref, hc_ref, pool_ref, *,
                         eps, nc_total):
    nc = pl.program_id(1)

    @pl.when(nc == 0)
    def _init():
        pool_ref[...] = jnp.zeros_like(pool_ref)

    c = c_ref[...].astype(jnp.float32)                     # (Bb, TNc, Dc)
    cn = _layernorm_rows(c, gc_ref[...], bcst_ref[...], eps)
    pool_ref[...] += cn.sum(axis=1)                        # running seq-sum

    @pl.when(nc == pl.num_programs(1) - 1)
    def _finalize():
        c_pool = (pool_ref[...] * (1.0 / nc_total)).astype(wc_ref.dtype)
        hc_ref[...] = jnp.dot(c_pool, wc_ref[...],
                              preferred_element_type=jnp.float32)  # (Bb, D)


def context_pool_bias(context, g_c, b_c, w_c_bf16, *, eps=LN_EPS,
                      batch_tile=8, seq_tile=512):
    B, Nc, Dc = context.shape
    D = w_c_bf16.shape[1]
    bt = _largest_divisor_leq(B, batch_tile)
    tnc = _largest_divisor_leq(Nc, seq_tile)
    gc2 = g_c.astype(jnp.float32).reshape(1, Dc)
    bc2 = b_c.astype(jnp.float32).reshape(1, Dc)

    cost = pl.CostEstimate(
        flops=int(10 * B * Nc * Dc + 2 * B * Dc * D),
        transcendentals=int(B * Nc),
        bytes_accessed=int(4 * B * Nc * Dc + 4 * B * D + 2 * Dc * D + 8 * Dc))

    kernel = functools.partial(_context_pool_kernel, eps=eps, nc_total=Nc)
    return pl.pallas_call(
        kernel,
        out_shape=jax.ShapeDtypeStruct((B, D), jnp.float32),
        grid=(B // bt, Nc // tnc),
        in_specs=[
            pl.BlockSpec((bt, tnc, Dc), lambda b, n: (b, n, 0)),      # context
            pl.BlockSpec(memory_space=pltpu.MemorySpace.VMEM),        # gamma_c
            pl.BlockSpec(memory_space=pltpu.MemorySpace.VMEM),        # beta_c
            pl.BlockSpec(memory_space=pltpu.MemorySpace.VMEM),        # W_c bf16
        ],
        out_specs=pl.BlockSpec((bt, D), lambda b, n: (b, 0)),
        scratch_shapes=[pltpu.VMEM((bt, Dc), jnp.float32)],
        compiler_params=pltpu.CompilerParams(
            dimension_semantics=("parallel", "arbitrary"),
            vmem_limit_bytes=_VMEM_LIMIT),
        cost_estimate=cost,
    )(context, gc2, bc2, w_c_bf16)


# ----------------------------------------------------------------------------
# Kernel 2: main path — LN(x), bf16 matmul on MXU (f32 acc), + b_fn (+ hc).
# ----------------------------------------------------------------------------
def _prenorm_main_kernel(x_ref, gx_ref, bx_ref, wx_ref, bfn_ref, hc_ref,
                         o_ref, *, eps):
    bt, tn, d = x_ref.shape
    x = x_ref[...].astype(jnp.float32).reshape(bt * tn, d)
    xn = _layernorm_rows(x, gx_ref[...], bx_ref[...], eps)
    h = jnp.dot(xn.astype(wx_ref.dtype), wx_ref[...],
                preferred_element_type=jnp.float32) + bfn_ref[...]
    h = h.reshape(bt, tn, d) + hc_ref[...].reshape(bt, 1, d)
    o_ref[...] = h.astype(o_ref.dtype)


def _prenorm_noctx_kernel(x_ref, gx_ref, bx_ref, wx_ref, bfn_ref, o_ref, *, eps):
    bt, tn, d = x_ref.shape
    x = x_ref[...].astype(jnp.float32).reshape(bt * tn, d)
    xn = _layernorm_rows(x, gx_ref[...], bx_ref[...], eps)
    h = jnp.dot(xn.astype(wx_ref.dtype), wx_ref[...],
                preferred_element_type=jnp.float32) + bfn_ref[...]
    o_ref[...] = h.reshape(bt, tn, d).astype(o_ref.dtype)


def prenorm_main(x, hc, g_x, b_x, w_x_bf16, b_fn, *, eps=LN_EPS,
                 batch_tile=8, seq_tile=512):
    B, N, D = x.shape
    bt = _largest_divisor_leq(B, batch_tile)
    tn = _largest_divisor_leq(N, seq_tile)
    gx2 = g_x.astype(jnp.float32).reshape(1, D)
    bx2 = b_x.astype(jnp.float32).reshape(1, D)
    bfn2 = b_fn.astype(jnp.float32).reshape(1, D)

    cost = pl.CostEstimate(
        flops=int(2 * B * N * D * D + 12 * B * N * D),
        transcendentals=int(B * N),
        bytes_accessed=int(8 * B * N * D + 2 * D * D + 4 * B * D + 12 * D))

    params_resident = pl.BlockSpec(memory_space=pltpu.MemorySpace.VMEM)
    if hc is not None:
        kernel = functools.partial(_prenorm_main_kernel, eps=eps)
        in_specs = [
            pl.BlockSpec((bt, tn, D), lambda b, n: (b, n, 0)),  # x
            params_resident,                                     # gamma_x
            params_resident,                                     # beta_x
            params_resident,                                     # W_x bf16
            params_resident,                                     # b_fn
            pl.BlockSpec((bt, D), lambda b, n: (b, 0)),          # hc (per-batch)
        ]
        args = (x, gx2, bx2, w_x_bf16, bfn2, hc)
    else:
        kernel = functools.partial(_prenorm_noctx_kernel, eps=eps)
        in_specs = [
            pl.BlockSpec((bt, tn, D), lambda b, n: (b, n, 0)),
            params_resident, params_resident, params_resident, params_resident,
        ]
        args = (x, gx2, bx2, w_x_bf16, bfn2)

    return pl.pallas_call(
        kernel,
        out_shape=jax.ShapeDtypeStruct((B, N, D), x.dtype),
        grid=(B // bt, N // tn),
        in_specs=in_specs,
        out_specs=pl.BlockSpec((bt, tn, D), lambda b, n: (b, n, 0)),
        compiler_params=pltpu.CompilerParams(
            dimension_semantics=("parallel", "parallel"),
            vmem_limit_bytes=_VMEM_LIMIT),
        cost_estimate=cost,
    )(*args)


# ----------------------------------------------------------------------------
# PreNorm module (parameters + fused forward)
# ----------------------------------------------------------------------------
class PreNormPallas:
    """PreNorm(dim, fn, context_dim) where `fn` is a deterministic linear
    mixer owned here so the whole forward can run in Pallas."""
    # TODO(synk): an arbitrary injected nn.Module `fn` cannot be fused
    # in-kernel; only this linear-mixer stand-in is fused.

    def __init__(self, dim, context_dim=None, *, key):
        self.dim = dim
        self.context_dim = context_dim
        k = jax.random.split(key, 7)
        self.g_x = 1.0 + 0.1 * jax.random.normal(k[0], (dim,), jnp.float32)
        self.b_x = 0.1 * jax.random.normal(k[1], (dim,), jnp.float32)
        self.W_x = 0.05 * jax.random.normal(k[2], (dim, dim), jnp.float32)
        self.b_fn = 0.05 * jax.random.normal(k[3], (dim,), jnp.float32)
        # Pre-cast weights to bf16 ONCE (fed straight to the MXU, f32 acc).
        self.W_x_bf16 = self.W_x.astype(jnp.bfloat16)
        if context_dim is not None:
            self.g_c = 1.0 + 0.1 * jax.random.normal(k[4], (context_dim,), jnp.float32)
            self.b_c = 0.1 * jax.random.normal(k[5], (context_dim,), jnp.float32)
            self.W_c = 0.05 * jax.random.normal(k[6], (context_dim, dim), jnp.float32)
            self.W_c_bf16 = self.W_c.astype(jnp.bfloat16)
        else:
            self.g_c = self.b_c = self.W_c = self.W_c_bf16 = None

    def __call__(self, x, **kwargs):
        if self.context_dim is not None:
            hc = context_pool_bias(kwargs["context"], self.g_c, self.b_c,
                                   self.W_c_bf16)
            return prenorm_main(x, hc, self.g_x, self.b_x, self.W_x_bf16,
                                self.b_fn)
        return prenorm_main(x, None, self.g_x, self.b_x, self.W_x_bf16,
                            self.b_fn)

    # Pure-JAX f32 reference for verification.
    def reference(self, x, **kwargs):
        xn = layernorm_ref(x, self.g_x, self.b_x)
        h = xn @ self.W_x + self.b_fn
        if self.context_dim is not None:
            cn = layernorm_ref(kwargs["context"], self.g_c, self.b_c)
            h = h + (jnp.mean(cn, axis=1) @ self.W_c)[:, None, :]
        return h


def layernorm_ref(x, g, b, eps=LN_EPS):
    mean = jnp.mean(x, axis=-1, keepdims=True)
    var = jnp.mean((x - mean) ** 2, axis=-1, keepdims=True)
    return (x - mean) / jnp.sqrt(var + eps) * g + b


if __name__ == "__main__":
    B, N, D = 2, 8, 32      # x: batch, seq, dim
    Nc, Dc = 4, 16          # context: ctx-seq, ctx-dim

    root = jax.random.PRNGKey(0)
    kx, kc, kp, kp2 = jax.random.split(root, 4)

    x = jax.random.normal(kx, (B, N, D), jnp.float32)
    context = jax.random.normal(kc, (B, Nc, Dc), jnp.float32)

    # Tolerances are loosened vs the f32 reference because the MXU is fed
    # bf16 operands (f32 accumulation).
    ATOL = RTOL = 2e-2

    # --- with context ----------------------------------------------------
    prenorm = PreNormPallas(D, context_dim=Dc, key=kp)
    out = jax.block_until_ready(prenorm(x, context=context))
    ref = prenorm.reference(x, context=context)
    assert out.shape == (B, N, D)
    assert jnp.allclose(out, ref, atol=ATOL, rtol=RTOL), float(
        jnp.max(jnp.abs(out - ref)))

    # --- without context (norm_context is None branch) --------------------
    prenorm2 = PreNormPallas(D, context_dim=None, key=kp2)
    out2 = jax.block_until_ready(prenorm2(x))
    ref2 = prenorm2.reference(x)
    assert out2.shape == (B, N, D)
    assert jnp.allclose(out2, ref2, atol=ATOL, rtol=RTOL), float(
        jnp.max(jnp.abs(out2 - ref2)))

    print("KERNEL_OK")
</pallas_src>

<mosaic_0001>
module attributes {stable_mosaic.version = 11 : i64} {
  func.func @_context_pool_kernel(%arg0: i32, %arg1: i32, %arg2: memref<2x4x16xf32, #tpu.memory_space<vmem>>, %arg3: memref<1x16xf32, #tpu.memory_space<vmem>>, %arg4: memref<1x16xf32, #tpu.memory_space<vmem>>, %arg5: memref<16x32xbf16, #tpu.memory_space<vmem>>, %arg6: memref<2x32xf32, #tpu.memory_space<vmem>>, %arg7: memref<2x16xf32, #tpu.memory_space<vmem>>) attributes {dimension_semantics = [#tpu.dimension_semantics<parallel>, #tpu.dimension_semantics<arbitrary>], iteration_bounds = array<i64: 1, 1>, scalar_prefetch = 0 : i64, scratch_operands = 1 : i64, tpu.core_type = #tpu.core_type<tc>, window_params = [{transform_indices = @transform_0, window_bounds = array<i64: 2, 4, 16>}, {pipeline_mode = #tpu.pipeline_mode<synchronous>, transform_indices = @transform_1, window_bounds = array<i64: 1, 16>}, {pipeline_mode = #tpu.pipeline_mode<synchronous>, transform_indices = @transform_2, window_bounds = array<i64: 1, 16>}, {pipeline_mode = #tpu.pipeline_mode<synchronous>, transform_indices = @transform_3, window_bounds = array<i64: 16, 32>}, {transform_indices = @transform_4, window_bounds = array<i64: 2, 32>}]} {
    %c0_i32 = arith.constant 0 : i32
    %0 = arith.cmpi eq, %arg1, %c0_i32 : i32
    %1 = arith.extui %0 : i1 to i32
    %c0_i32_0 = arith.constant 0 : i32
    %2 = arith.cmpi ne, %1, %c0_i32_0 : i32
    scf.if %2 {
      %cst_18 = arith.constant 0.000000e+00 : f32
      %35 = vector.broadcast %cst_18 : f32 to vector<2x16xf32>
      %c0_19 = arith.constant 0 : index
      %c0_20 = arith.constant 0 : index
      %36 = vector.load %arg7[%c0_19, %c0_20] : memref<2x16xf32, #tpu.memory_space<vmem>>, vector<2x16xf32>
      tpu.vector_store %arg7[%c0_19, %c0_20], %35 {strides = array<i32>} : memref<2x16xf32, #tpu.memory_space<vmem>>, vector<2x16xf32>,
    } else {
    }
    %c0 = arith.constant 0 : index
    %c0_1 = arith.constant 0 : index
    %c0_2 = arith.constant 0 : index
    %3 = vector.load %arg2[%c0, %c0_1, %c0_2] : memref<2x4x16xf32, #tpu.memory_space<vmem>>, vector<2x4x16xf32>
    %c0_3 = arith.constant 0 : index
    %c0_4 = arith.constant 0 : index
    %4 = vector.load %arg3[%c0_3, %c0_4] : memref<1x16xf32, #tpu.memory_space<vmem>>, vector<1x16xf32>
    %c0_5 = arith.constant 0 : index
    %c0_6 = arith.constant 0 : index
    %5 = vector.load %arg4[%c0_5, %c0_6] : memref<1x16xf32, #tpu.memory_space<vmem>>, vector<1x16xf32>
    %cst = arith.constant dense<0.000000e+00> : vector<2x4xf32>
    %6 = vector.multi_reduction <add>, %3, %cst [2] : vector<2x4x16xf32> to vector<2x4xf32>
    %7 = vector.shape_cast %6 : vector<2x4xf32> to vector<2x4x1xf32>
    %cst_7 = arith.constant 1.600000e+01 : f32
    %8 = vector.broadcast %cst_7 : f32 to vector<2x4x1xf32>
    %9 = arith.divf %7, %8 : vector<2x4x1xf32>
    %10 = vector.broadcast %9 : vector<2x4x1xf32> to vector<2x4x16xf32>
    %11 = arith.subf %3, %10 : vector<2x4x16xf32>
    %12 = arith.mulf %11, %11 : vector<2x4x16xf32>
    %cst_8 = arith.constant dense<0.000000e+00> : vector<2x4xf32>
    %13 = vector.multi_reduction <add>, %12, %cst_8 [2] : vector<2x4x16xf32> to vector<2x4xf32>
    %14 = vector.shape_cast %13 : vector<2x4xf32> to vector<2x4x1xf32>
    %cst_9 = arith.constant 1.600000e+01 : f32
    %15 = vector.broadcast %cst_9 : f32 to vector<2x4x1xf32>
    %16 = arith.divf %14, %15 : vector<2x4x1xf32>
    %cst_10 = arith.constant 9.99999974E-6 : f32
    %17 = vector.broadcast %cst_10 : f32 to vector<2x4x1xf32>
    %18 = arith.addf %16, %17 : vector<2x4x1xf32>
    %19 = math.rsqrt %18 : vector<2x4x1xf32>
    %20 = vector.shape_cast %4 : vector<1x16xf32> to vector<1x1x16xf32>
    %21 = vector.broadcast %19 : vector<2x4x1xf32> to vector<2x4x16xf32>
    %22 = vector.broadcast %20 : vector<1x1x16xf32> to vector<2x4x16xf32>
    %23 = arith.mulf %21, %22 : vector<2x4x16xf32>
    %24 = arith.mulf %11, %23 : vector<2x4x16xf32>
    %25 = vector.shape_cast %5 : vector<1x16xf32> to vector<1x1x16xf32>
    %26 = vector.broadcast %25 : vector<1x1x16xf32> to vector<2x4x16xf32>
    %27 = arith.addf %24, %26 : vector<2x4x16xf32>
    %c0_11 = arith.constant 0 : index
    %c0_12 = arith.constant 0 : index
    %28 = vector.load %arg7[%c0_11, %c0_12] : memref<2x16xf32, #tpu.memory_space<vmem>>, vector<2x16xf32>
    %cst_13 = arith.constant dense<0.000000e+00> : vector<2x16xf32>
    %29 = vector.multi_reduction <add>, %27, %cst_13 [1] : vector<2x4x16xf32> to vector<2x16xf32>
    %30 = arith.addf %28, %29 : vector<2x16xf32>
    %c0_14 = arith.constant 0 : index
    %c0_15 = arith.constant 0 : index
    %31 = vector.load %arg7[%c0_14, %c0_15] : memref<2x16xf32, #tpu.memory_space<vmem>>, vector<2x16xf32>
    tpu.vector_store %arg7[%c0_14, %c0_15], %30 {strides = array<i32>} : memref<2x16xf32, #tpu.memory_space<vmem>>, vector<2x16xf32>,
    %c0_i32_16 = arith.constant 0 : i32
    %32 = arith.cmpi eq, %arg1, %c0_i32_16 : i32
    %33 = arith.extui %32 : i1 to i32
    %c0_i32_17 = arith.constant 0 : i32
    %34 = arith.cmpi ne, %33, %c0_i32_17 : i32
    scf.if %34 {
      %c0_18 = arith.constant 0 : index
      %c0_19 = arith.constant 0 : index
      %35 = vector.load %arg7[%c0_18, %c0_19] : memref<2x16xf32, #tpu.memory_space<vmem>>, vector<2x16xf32>
      %cst_20 = arith.constant 2.500000e-01 : f32
      %36 = vector.broadcast %cst_20 : f32 to vector<2x16xf32>
      %37 = arith.mulf %35, %36 : vector<2x16xf32>
      %38 = arith.truncf %37 : vector<2x16xf32> to vector<2x16xbf16>
      %c0_21 = arith.constant 0 : index
      %c0_22 = arith.constant 0 : index
      %39 = vector.load %arg5[%c0_21, %c0_22] : memref<16x32xbf16, #tpu.memory_space<vmem>>, vector<16x32xbf16>
      %cst_23 = arith.constant dense<0.000000e+00> : vector<2x32xf32>
      %40 = tpu.matmul %38, %39, %cst_23 {dimension_numbers = #tpu.dot_dimension_numbers<[1], [0], [0], [1], [0, 0, 1, 1], [], []>} : vector<2x16xbf16>, vector<16x32xbf16>, vector<2x32xf32> -> vector<2x32xf32>
      %c0_24 = arith.constant 0 : index
      %c0_25 = arith.constant 0 : index
      %41 = vector.load %arg6[%c0_24, %c0_25] : memref<2x32xf32, #tpu.memory_space<vmem>>, vector<2x32xf32>
      tpu.vector_store %arg6[%c0_24, %c0_25], %40 {strides = array<i32>} : memref<2x32xf32, #tpu.memory_space<vmem>>, vector<2x32xf32>,
    } else {
    }
    return
  }
  func.func @transform_0(%arg0: i32, %arg1: i32) -> (i32, i32, i32) {
    %c0_i32 = arith.constant 0 : i32
    %c0_i32_0 = arith.constant 0 : i32
    return %arg0, %arg1, %c0_i32 : i32, i32, i32
  }
  func.func @transform_1(%arg0: i32, %arg1: i32) -> (i32, i32) {
    %c0_i32 = arith.constant 0 : i32
    %c0_i32_0 = arith.constant 0 : i32
    %c0_i32_1 = arith.constant 0 : i32
    return %c0_i32, %c0_i32_0 : i32, i32
  }
  func.func @transform_2(%arg0: i32, %arg1: i32) -> (i32, i32) {
    %c0_i32 = arith.constant 0 : i32
    %c0_i32_0 = arith.constant 0 : i32
    %c0_i32_1 = arith.constant 0 : i32
    return %c0_i32, %c0_i32_0 : i32, i32
  }
  func.func @transform_3(%arg0: i32, %arg1: i32) -> (i32, i32) {
    %c0_i32 = arith.constant 0 : i32
    %c0_i32_0 = arith.constant 0 : i32
    %c0_i32_1 = arith.constant 0 : i32
    return %c0_i32, %c0_i32_0 : i32, i32
  }
  func.func @transform_4(%arg0: i32, %arg1: i32) -> (i32, i32) {
    %c0_i32 = arith.constant 0 : i32
    %c0_i32_0 = arith.constant 0 : i32
    return %arg0, %c0_i32 : i32, i32
  }
}

</mosaic_0001>

<llo_original>
// kernel: tpu_custom_call.1
$region0: #{tpu_custom_call.1}
  #allocation0 [shape = 'u32[]', space=smem, size = 0x4, offset = 0x4, fixed_abs, tag = 'smem constant byte address 0x4 - core index']
  #allocation1 [shape = 'u32[144,128]{1,0:T(1,128)}', space=vmem, size = 0x12000, scoped, tag = 'internal scratch']
  #allocation2 [shape = 'f32[2,16]{1,0:T(2,128)}', space=vmem, size = 0x400, scoped, tag = 'scratch operand']
  %s0 = inlined_call_operand.hbm [shape: f32[2,4,16], index: 0, kind: input, shape index: {}]
  %s1 = inlined_call_operand.vmem [shape: f32[1,16], index: 1, kind: input, shape index: {}]
  %s2 = inlined_call_operand.vmem [shape: f32[1,16], index: 2, kind: input, shape index: {}]
  %s3 = inlined_call_operand.vmem [shape: bf16[16,32], index: 3, kind: input, shape index: {}]
  %s4 = inlined_call_operand.hbm [shape: f32[2,32], index: 4, kind: output, shape index: {}]
  %s5 = sld [smem:[#allocation0]]
  $region38: #{tpu_custom_call.1} parent=0
    _
  %s7 = ssub.s32 1, %s5
  %s8 = scalar_select 0, %s7, %s5
  $region1: #{tpu_custom_call.1} parent=0
    #allocation3 [shape = 'u8[4096]{0}', space=vmem, size = 0x1000, scoped, tag = 'input window, operand 0, single buffered']
    #allocation4 [shape = 's32[1]{0}', space=sflag, size = 0x4, scoped, tag = 'scoped memory for tpu_custom_call.1']
    #allocation5 [shape = 's32[1]{0}', space=sflag, size = 0x4, scoped, tag = 'scoped memory for tpu_custom_call.1']
    #allocation6 [shape = 'u8[1024]{0}', space=vmem, size = 0x400, scoped, tag = 'output window, operand 0, single buffered']
    %9 = vsyncpa [#allocation4], 0
    %10 = vsyncpa [#allocation5], 0
    // Predicated region
    $region2: #{tpu_custom_call.1} parent=1 // pred_check
      _
    $region3: #{tpu_custom_call.1} parent=1 // pred_check_branch
      %12 = sbr.rel (0) target = $region5
    $region4: #{tpu_custom_call.1} parent=1 // pred_region
      %s14 = ssub.s32 128, 128
      %15 = vsyncadd [#allocation4], %s14
      %s16 = sshll.u32 [#allocation3], 4
      %s17 = int_to_ptr.vmem [resolvable:$true] %s16
      %22 = dma.hbm_to_vmem [thread:$0]  %s0, 128, %s17, [#allocation4], 64, 64, 4
    $region5: #{tpu_custom_call.1} parent=1 // pred_fallthru
      _
    // Predicated region
    $region6: #{tpu_custom_call.1} parent=1 // pred_check
      _
    $region7: #{tpu_custom_call.1} parent=1 // pred_check_branch
      %24 = sbr.rel (0) target = $region9
    $region8: #{tpu_custom_call.1} parent=1 // pred_region
      _
    $region9: #{tpu_custom_call.1} parent=1 // pred_fallthru
      _
    // Predicated region
    $region10: #{tpu_custom_call.1} parent=1 // pred_check
      _
    $region11: #{tpu_custom_call.1} parent=1 // pred_check_branch
      %26 = sbr.rel (0) target = $region13
    $region12: #{tpu_custom_call.1} parent=1 // pred_region
      _
    $region13: #{tpu_custom_call.1} parent=1 // pred_fallthru
      _
    // Predicated region
    $region14: #{tpu_custom_call.1} parent=1 // pred_check
      _
    $region15: #{tpu_custom_call.1} parent=1 // pred_check_branch
      %28 = sbr.rel (0) target = $region17
    $region16: #{tpu_custom_call.1} parent=1 // pred_region
      _
    $region17: #{tpu_custom_call.1} parent=1 // pred_fallthru
      _
    // Predicated region
    $region18: #{tpu_custom_call.1} parent=1 // pred_check
      _
    $region19: #{tpu_custom_call.1} parent=1 // pred_check_branch
      %30 = sbr.rel (0) target = $region21
    $region20: #{tpu_custom_call.1} parent=1 // pred_region
      %31 = dma.done [#allocation4], 128
    $region21: #{tpu_custom_call.1} parent=1 // pred_fallthru
      _
    %p33 = scmp.eq.s32.totalorder 0, 0
    // Predicated region
    $region22: #{tpu_custom_call.1} parent=1 // pred_check
      %p34 = pneg %p33
    $region23: #{tpu_custom_call.1} parent=1 // pred_check_branch
      %36 = sbr.rel (%p34) target = $region25
    $region24: #{tpu_custom_call.1} parent=1 // pred_region
      %vm37 = vcmask 123904
      %38 = vst.msk [vmem:[#allocation2] sm:$0x3] %vm37, 0.0
    $region25: #{tpu_custom_call.1} parent=1 // pred_fallthru
      _
    %v39 = vld [vmem:[#allocation3] sm:$0xf]
    %v40 = vld [vmem:[#allocation3 + $0x4] sm:$0xf]
    %v41 = vld [vmem:[%s1] sm:$0x1]
    %v42 = vld [vmem:[%s2] sm:$0x1]
    %vm43 = vcmask 125952
    %v44 = vsel %vm43, %v39, 0.0
    %45 = vadd.xlane.f32.xlu0 %v44
    %v46 = vpop.xlane.xlu0 %45
    %v47 = vsel %vm43, %v40, 0.0
    %48 = vadd.xlane.f32.xlu0 %v47
    %v49 = vpop.xlane.xlu0 %48
    %v50 = vrcp.pop 16.0
    %v51 = vmul.f32 %v46, %v50
    %v52 = vmul.f32 %v49, %v50
    %v53 = vsub.f32 %v39, %v51
    %v54 = vsub.f32 %v40, %v52
    %v55 = vmul.f32 %v53, %v53
    %v56 = vmul.f32 %v54, %v54
    %v57 = vsel %vm43, %v55, 0.0
    %58 = vadd.xlane.f32.xlu0 %v57
    %v59 = vpop.xlane.xlu0 %58
    %v60 = vsel %vm43, %v56, 0.0
    %61 = vadd.xlane.f32.xlu0 %v60
    %v62 = vpop.xlane.xlu0 %61
    %v63 = vmul.f32 %v59, %v50
    %v64 = vmul.f32 %v62, %v50
    %v65 = vadd.f32 %v63, 1e-05
    %v66 = vadd.f32 %v64, 1e-05
    %v67 = vrsqrt.pop %v65
    %v68 = vrsqrt.pop %v66
    %v70 = vlaneseq
    %v71 = vshrl.u32 %v70, 7
    %v72 = vsub.s32 0, %v71
    %v73 = vrot.slane %v41, %v72
    %v75 = vmul.f32 %v67, %v73
    %v76 = vmul.f32 %v68, %v73
    %v77 = vmul.f32 %v53, %v75
    %v78 = vmul.f32 %v54, %v76
    %v80 = vlaneseq
    %v81 = vshrl.u32 %v80, 7
    %v82 = vsub.s32 0, %v81
    %v83 = vrot.slane %v42, %v82
    %v85 = vadd.f32 %v77, %v83
    %v86 = vadd.f32 %v78, %v83
    %v87 = vld [vmem:[#allocation2] sm:$0x3]
    %v88 = vsel %vm43, %v85, 0.0
    %v89 = vrot.slane %v88, 4
    %v90 = vadd.f32 %v88, %v89
    %v91 = vrot.slane %v90, 2
    %v92 = vadd.f32 %v90, %v91
    %v93 = vrot.slane %v92, 1
    %v94 = vadd.f32 %v92, %v93
    %v95 = vsel %vm43, %v86, 0.0
    %v96 = vrot.slane %v95, 4
    %v97 = vadd.f32 %v95, %v96
    %v98 = vrot.slane %v97, 2
    %v99 = vadd.f32 %v97, %v98
    %v100 = vrot.slane %v99, 1
    %v101 = vadd.f32 %v99, %v100
    %vm104 = vcmask 1041409
    %v105 = vsel %vm104, %v101, %v94
    %v107 = vadd.f32 %v87, %v105
    %vm108 = vcmask 123904
    %109 = vst.msk [vmem:[#allocation2] sm:$0x3] %vm108, %v107
    // Predicated region
    $region26: #{tpu_custom_call.1} parent=1 // pred_check
      %p110 = pneg %p33
    $region27: #{tpu_custom_call.1} parent=1 // pred_check_branch
      %112 = sbr.rel (%p110) target = $region29
    $region28: #{tpu_custom_call.1} parent=1 // pred_region
      %v113 = vld [vmem:[#allocation2] sm:$0x3]
      %v114 = vmul.f32 %v113, 0.25
      %v115 = vpack.c.bf16 %v114, %v114
      %v116 = vld [vmem:[%s3] sm:$0xf]
      %v117 = vld [vmem:[%s3 + $0x4] sm:$0xf]
      %v120 = vunpack.c.l.b16 %v116
      %v121 = vunpack.c.l.b16 %v117
      %v122 = vpack.c.b16 %v121, %v120
      %vm124 = vcmask 130048
      %v126 = vsel %vm124, %v115, 0
      %128 = vmatprep.subr.bf16.mxu0 0
      %129 = vmatpush1.bf16.msra.mxu0 %v122
      %130 = vmatprep.subr.bf16.mxu0 0
      %131 = vmatpush1.bf16.msra.mxu0 0
      %132 = vmatprep.subr.bf16.mxu0 0
      %133 = vmatpush1.bf16.msra.mxu0 0
      %134 = vmatprep.subr.bf16.mxu0 0
      %135 = vmatpush1.bf16.msra.mxu0 0
      %136 = vmatprep.subr.bf16.mxu0 0
      %137 = vmatpush1.bf16.msra.mxu0 0
      %138 = vmatprep.subr.bf16.mxu0 0
      %139 = vmatpush1.bf16.msra.mxu0 0
      %140 = vmatprep.subr.bf16.mxu0 0
      %141 = vmatpush1.bf16.msra.mxu0 0
      %142 = vmatprep.subr.bf16.mxu0 0
      %143 = vmatpush1.bf16.msra.mxu0 0
      %144 = vmatprep.subr.bf16.mxu0 0
      %145 = vmatpush1.bf16.msra.mxu0 0
      %146 = vmatprep.subr.bf16.mxu0 0
      %147 = vmatpush1.bf16.msra.mxu0 0
      %148 = vmatprep.subr.bf16.mxu0 0
      %149 = vmatpush1.bf16.msra.mxu0 0
      %150 = vmatprep.subr.bf16.mxu0 0
      %151 = vmatpush1.bf16.msra.mxu0 0
      %152 = vmatprep.subr.bf16.mxu0 0
      %153 = vmatpush1.bf16.msra.mxu0 0
      %154 = vmatprep.subr.bf16.mxu0 0
      %155 = vmatpush1.bf16.msra.mxu0 0
      %156 = vmatprep.subr.bf16.mxu0 0
      %157 = vmatpush1.bf16.msra.mxu0 0
      %158 = vmatprep.subr.bf16.mxu0 0
      %159 = vmatpush1.bf16.msra.mxu0 0
      %160 = vmatprep.mubr.bf16.mxu0 0
      %161 = vmatmul.mubr.bf16.gmra.mrb[0].mxu0 %v126
      %v162 = vpop.f32.mrb[0].mxu0
      %v163 = vadd.f32 0.0, %v162
      %v164 = vpop.f32.mrb[0].mxu0
      %v165 = vpop.f32.mrb[0].mxu0
      %v166 = vpop.f32.mrb[0].mxu0
      %167 = vdwg.mxu0
      %vm168 = vcmask 254976
      %169 = vst.msk [vmem:[#allocation6] sm:$0x3] %vm168, %v163
    $region29: #{tpu_custom_call.1} parent=1 // pred_fallthru
      _
    // Predicated region
    $region30: #{tpu_custom_call.1} parent=1 // pred_check
      _
    $region31: #{tpu_custom_call.1} parent=1 // pred_check_branch
      %171 = sbr.rel (0) target = $region33
    $region32: #{tpu_custom_call.1} parent=1 // pred_region
      %s173 = ssub.s32 32, 32
      %174 = vsyncadd [#allocation5], %s173
      %s176 = sshll.u32 [#allocation6], 4
      %s177 = int_to_ptr.vmem [resolvable:$true] %s176
      %179 = dma.vmem_to_hbm [thread:$0]  %s177, 32, %s4, [#allocation5]
    $region33: #{tpu_custom_call.1} parent=1 // pred_fallthru
      _
    // Predicated region
    $region34: #{tpu_custom_call.1} parent=1 // pred_check
      _
    $region35: #{tpu_custom_call.1} parent=1 // pred_check_branch
      %181 = sbr.rel (0) target = $region37
    $region36: #{tpu_custom_call.1} parent=1 // pred_region
      %182 = dma.done [#allocation5], 32
    $region37: #{tpu_custom_call.1} parent=1 // pred_fallthru
      _
    %183 = vsyncpa [#allocation4], 1
    %184 = vsyncpa [#allocation5], 1

</llo_original>
